<compile_context>
chip_gen: v6e
topology: v6e:2x2x1
jax: 0.10.0
libtpu: 0.0.40
codegen_flags: <defaults>
</compile_context>

<pallas_src>
import functools

import jax
import jax.numpy as jnp
from jax.experimental import pallas as pl
from jax.experimental.pallas import tpu as pltpu

LANE = 128
ROW_TILE = 16                     # bf16 sublane packing: 16 rows / vreg
NEG_SLOPE = 0.01                  # nn.LeakyReLU default
BN_EPS = 1e-5                     # nn.BatchNorm1d default
HIDDEN_DIMS = (256, 128, 64, 1)   # output widths of the four Linear layers
VMEM_BLOCK_BUDGET = 40 * 2 ** 20  # headroom under v7x's 64 MiB physical VMEM
VMEM_LIMIT_CAP = 60 * 2 ** 20


def _round_up(x, m):
    return (x + m - 1) // m * m


# ----------------------------------------------------------------------------
# Fused kernel: one tile of batch rows through all four layers.
# ----------------------------------------------------------------------------
def _bias_leaky(h_f32, b_ref):
    # f32 bias add, one cast to bf16 (needed for the next MXU matmul anyway),
    # LeakyReLU as a single bf16 maximum (no cmp+select).
    h = (h_f32 + b_ref[...]).astype(jnp.bfloat16)
    return jnp.maximum(h, NEG_SLOPE * h)


def _head_kernel(x_ref, w1_ref, b1_ref, w2_ref, b2_ref, w3_ref, b3_ref,
                 w4_ref, b4_ref, o_ref):
    # Layers 1-3: Linear (BN folded in the wrapper) -> LeakyReLU.
    # Dropout = identity in eval mode.
    h = jnp.dot(x_ref[...], w1_ref[...], preferred_element_type=jnp.float32)
    h = _bias_leaky(h, b1_ref)
    h = jnp.dot(h, w2_ref[...], preferred_element_type=jnp.float32)
    h = _bias_leaky(h, b2_ref)
    h = jnp.dot(h, w3_ref[...], preferred_element_type=jnp.float32)
    h = _bias_leaky(h, b3_ref)
    # Layer 4: final Linear.  Only column 0 is real -> store just that column
    # so HBM writeback is 4 B/row instead of 512 B/row.
    h = jnp.dot(h, w4_ref[...], preferred_element_type=jnp.float32)
    o_ref[...] = (h[:, :1] + b4_ref[...]).astype(o_ref.dtype)


# ----------------------------------------------------------------------------
# One-time parameter prep (hoisted out of the forward path).
# ----------------------------------------------------------------------------
def _fold_bn(w, b, gamma, beta, mean, var):
    # BN(x @ W + b) == x @ (W * s) + (b * s + beta - mean * s)
    s = gamma / jnp.sqrt(var + BN_EPS)
    return w * s[None, :], b * s + (beta - mean * s)


def _pad2(a, rows, cols):
    return jnp.pad(a, ((0, rows - a.shape[0]), (0, cols - a.shape[1])))


def prepare_classification_head_params(params):
    """Fold eval-mode BN into the Linears, zero-pad to the 128-lane width and
    cast MXU operands to bf16.  Call once; reuse across forward calls."""
    input_dim = params[0]["w"].shape[0]
    dims = (input_dim,) + HIDDEN_DIMS
    dims_p = tuple(_round_up(d, LANE) for d in dims)
    ws, bs = [], []
    for li, layer in enumerate(params):
        w, b = layer["w"], layer["b"]
        if "gamma" in layer:
            w, b = _fold_bn(w, b, layer["gamma"], layer["beta"],
                            layer["mean"], layer["var"])
        ws.append(_pad2(w, dims_p[li], dims_p[li + 1]).astype(jnp.bfloat16))
        bs.append(_pad2(b[None, :], 1, dims_p[li + 1]).astype(jnp.float32))
    bs[-1] = bs[-1][:, :1]          # final bias: keep only the real column
    return {"ws": tuple(ws), "bs": tuple(bs)}


# ----------------------------------------------------------------------------
# Forward wrapper: row tiling, VMEM budgeting, pallas_call.
# ----------------------------------------------------------------------------
def _choose_row_tile(b_rows, dims_p, weight_bytes, max_block_rows):
    b16 = _round_up(b_rows, ROW_TILE)
    tm = min(_round_up(max_block_rows, ROW_TILE), b16)

    def vmem_est(t):
        return (2 * t * dims_p[0] * 2          # double-buffered bf16 x blocks
                + 2 * t * 4                    # double-buffered f32 (t,1) out
                + t * sum(dims_p[1:]) * 4      # live intermediates (f32 bound)
                + 2 * weight_bytes)            # resident weights/biases

    # Shrink tile until blocks fit the budget (v7x: 64 MiB physical VMEM).
    while vmem_est(tm) > VMEM_BLOCK_BUDGET and tm > ROW_TILE:
        tm = max(ROW_TILE, _round_up(tm // 2, ROW_TILE))
    # Give v7x's two TensorCores >= 2 grid steps whenever the batch allows.
    if tm >= b16 and b16 >= 2 * ROW_TILE:
        tm = _round_up(b16 // 2, ROW_TILE)
    b_pad = _round_up(b_rows, tm)
    return tm, b_pad, vmem_est(tm)


@functools.partial(jax.jit, static_argnames=("max_block_rows",))
def classification_head_forward(x, prepared, *, max_block_rows=1024):
    ws, bs = prepared["ws"], prepared["bs"]
    b_rows, _ = x.shape
    dims_p = (ws[0].shape[0],) + tuple(w.shape[1] for w in ws)

    weight_bytes = (sum(int(w.size) * 2 for w in ws)
                    + sum(int(b.size) * 4 for b in bs))
    tm, b_pad, vmem_est = _choose_row_tile(b_rows, dims_p, weight_bytes,
                                           max_block_rows)

    x_p = _pad2(x, b_pad, dims_p[0]).astype(jnp.bfloat16)

    def _const(shape):  # grid-invariant, full-array block (stays VMEM-resident)
        return pl.BlockSpec(shape, lambda i: (0, 0))

    flops = 2 * b_pad * sum(ci * co for ci, co in zip(dims_p[:-1], dims_p[1:]))
    bytes_accessed = x_p.size * 2 + weight_bytes + b_pad * 4

    out = pl.pallas_call(
        _head_kernel,
        out_shape=jax.ShapeDtypeStruct((b_pad, 1), jnp.float32),
        grid=(b_pad // tm,),
        in_specs=[
            pl.BlockSpec((tm, dims_p[0]), lambda i: (i, 0)),
            _const(ws[0].shape), _const(bs[0].shape),
            _const(ws[1].shape), _const(bs[1].shape),
            _const(ws[2].shape), _const(bs[2].shape),
            _const(ws[3].shape), _const(bs[3].shape),
        ],
        out_specs=pl.BlockSpec((tm, 1), lambda i: (i, 0)),
        compiler_params=pltpu.CompilerParams(
            dimension_semantics=("parallel",),
            vmem_limit_bytes=int(min(VMEM_LIMIT_CAP,
                                     max(32 * 2 ** 20, int(1.5 * vmem_est)))),
        ),
        cost_estimate=pl.CostEstimate(flops=flops, transcendentals=0,
                                      bytes_accessed=bytes_accessed),
    )(x_p, ws[0], bs[0], ws[1], bs[1], ws[2], bs[2], ws[3], bs[3])

    return out[:b_rows]


# ----------------------------------------------------------------------------
# Pure-JAX f32 reference (PyTorch eval-mode semantics) + param init.
# ----------------------------------------------------------------------------
def _reference_forward(x, params):
    h = x
    for layer in params:
        h = h @ layer["w"] + layer["b"]
        if "gamma" in layer:
            h = (h - layer["mean"]) / jnp.sqrt(layer["var"] + BN_EPS)
            h = h * layer["gamma"] + layer["beta"]
            h = jnp.where(h >= 0.0, h, NEG_SLOPE * h)   # Dropout = identity
    return h


def init_classification_head_params(key, input_dim):
    dims = (input_dim,) + HIDDEN_DIMS
    params = []
    for li in range(len(HIDDEN_DIMS)):
        fan_in, fan_out = dims[li], dims[li + 1]
        key, kw, kb, km, kv = jax.random.split(key, 5)
        bound = 1.0 / float(fan_in) ** 0.5
        w = jax.random.uniform(kw, (fan_in, fan_out), jnp.float32, -bound, bound)
        b = jax.random.uniform(kb, (fan_out,), jnp.float32, -bound, bound)
        layer = {"w": w, "b": b}
        if li < len(HIDDEN_DIMS) - 1:  # BatchNorm1d after the first 3 Linears
            layer.update(
                gamma=jnp.ones((fan_out,), jnp.float32),
                beta=jnp.zeros((fan_out,), jnp.float32),
                mean=0.1 * jax.random.normal(km, (fan_out,), jnp.float32),
                var=1.0 + 0.1 * jax.random.uniform(kv, (fan_out,), jnp.float32),
            )
        params.append(layer)
    return params


# ----------------------------------------------------------------------------
# Main
# ----------------------------------------------------------------------------
if __name__ == "__main__":
    key = jax.random.PRNGKey(0)

    B, INPUT_DIM = 16, 96          # small deterministic problem
    kx, kp = jax.random.split(key)
    x = jax.random.normal(kx, (B, INPUT_DIM), jnp.float32)
    params = init_classification_head_params(kp, INPUT_DIM)

    prepared = prepare_classification_head_params(params)   # one-time prep
    out = classification_head_forward(x, prepared)
    jax.block_until_ready(out)

    assert out.shape == (B, 1)
    ref = _reference_forward(x, params)
    # bf16 MXU operands vs f32 reference: ~1e-2 relative error budget.
    assert jnp.allclose(out, ref, atol=5e-2, rtol=5e-2)
    print("KERNEL_OK")
</pallas_src>

<mosaic_0001>
module attributes {stable_mosaic.version = 11 : i64} {
  func.func @_head_kernel(%arg0: i32, %arg1: memref<16x128xbf16, #tpu.memory_space<vmem>>, %arg2: memref<128x256xbf16, #tpu.memory_space<vmem>>, %arg3: memref<1x256xf32, #tpu.memory_space<vmem>>, %arg4: memref<256x128xbf16, #tpu.memory_space<vmem>>, %arg5: memref<1x128xf32, #tpu.memory_space<vmem>>, %arg6: memref<128x128xbf16, #tpu.memory_space<vmem>>, %arg7: memref<1x128xf32, #tpu.memory_space<vmem>>, %arg8: memref<128x128xbf16, #tpu.memory_space<vmem>>, %arg9: memref<1x1xf32, #tpu.memory_space<vmem>>, %arg10: memref<16x1xf32, #tpu.memory_space<vmem>>) attributes {dimension_semantics = [#tpu.dimension_semantics<parallel>], iteration_bounds = array<i64: 1>, scalar_prefetch = 0 : i64, scratch_operands = 0 : i64, tpu.core_type = #tpu.core_type<tc>, window_params = [{transform_indices = @transform_0, window_bounds = array<i64: 16, 128>}, {pipeline_mode = #tpu.pipeline_mode<synchronous>, transform_indices = @transform_1, window_bounds = array<i64: 128, 256>}, {pipeline_mode = #tpu.pipeline_mode<synchronous>, transform_indices = @transform_2, window_bounds = array<i64: 1, 256>}, {pipeline_mode = #tpu.pipeline_mode<synchronous>, transform_indices = @transform_3, window_bounds = array<i64: 256, 128>}, {pipeline_mode = #tpu.pipeline_mode<synchronous>, transform_indices = @transform_4, window_bounds = array<i64: 1, 128>}, {pipeline_mode = #tpu.pipeline_mode<synchronous>, transform_indices = @transform_5, window_bounds = array<i64: 128, 128>}, {pipeline_mode = #tpu.pipeline_mode<synchronous>, transform_indices = @transform_6, window_bounds = array<i64: 1, 128>}, {pipeline_mode = #tpu.pipeline_mode<synchronous>, transform_indices = @transform_7, window_bounds = array<i64: 128, 128>}, {pipeline_mode = #tpu.pipeline_mode<synchronous>, transform_indices = @transform_8, window_bounds = array<i64: 1, 1>}, {transform_indices = @transform_9, window_bounds = array<i64: 16, 1>}]} {
    %c0 = arith.constant 0 : index
    %c0_0 = arith.constant 0 : index
    %0 = vector.load %arg1[%c0, %c0_0] : memref<16x128xbf16, #tpu.memory_space<vmem>>, vector<16x128xbf16>
    %c0_1 = arith.constant 0 : index
    %c0_2 = arith.constant 0 : index
    %1 = vector.load %arg2[%c0_1, %c0_2] : memref<128x256xbf16, #tpu.memory_space<vmem>>, vector<128x256xbf16>
    %cst = arith.constant dense<0.000000e+00> : vector<16x256xf32>
    %2 = tpu.matmul %0, %1, %cst {dimension_numbers = #tpu.dot_dimension_numbers<[1], [0], [0], [1], [0, 0, 1, 1], [], []>} : vector<16x128xbf16>, vector<128x256xbf16>, vector<16x256xf32> -> vector<16x256xf32>
    %c0_3 = arith.constant 0 : index
    %c0_4 = arith.constant 0 : index
    %3 = vector.load %arg3[%c0_3, %c0_4] : memref<1x256xf32, #tpu.memory_space<vmem>>, vector<1x256xf32>
    %4 = vector.broadcast %3 : vector<1x256xf32> to vector<16x256xf32>
    %5 = arith.addf %2, %4 : vector<16x256xf32>
    %6 = arith.truncf %5 : vector<16x256xf32> to vector<16x256xbf16>
    %cst_5 = arith.constant 1.000980e-02 : bf16
    %7 = vector.broadcast %cst_5 : bf16 to vector<16x256xbf16>
    %8 = arith.mulf %7, %6 : vector<16x256xbf16>
    %9 = arith.maximumf %6, %8 : vector<16x256xbf16>
    %c0_6 = arith.constant 0 : index
    %c0_7 = arith.constant 0 : index
    %10 = vector.load %arg4[%c0_6, %c0_7] : memref<256x128xbf16, #tpu.memory_space<vmem>>, vector<256x128xbf16>
    %cst_8 = arith.constant dense<0.000000e+00> : vector<16x128xf32>
    %11 = tpu.matmul %9, %10, %cst_8 {dimension_numbers = #tpu.dot_dimension_numbers<[1], [0], [0], [1], [0, 0, 1, 1], [], []>} : vector<16x256xbf16>, vector<256x128xbf16>, vector<16x128xf32> -> vector<16x128xf32>
    %c0_9 = arith.constant 0 : index
    %c0_10 = arith.constant 0 : index
    %12 = vector.load %arg5[%c0_9, %c0_10] : memref<1x128xf32, #tpu.memory_space<vmem>>, vector<1x128xf32>
    %13 = vector.broadcast %12 : vector<1x128xf32> to vector<16x128xf32>
    %14 = arith.addf %11, %13 : vector<16x128xf32>
    %15 = arith.truncf %14 : vector<16x128xf32> to vector<16x128xbf16>
    %cst_11 = arith.constant 1.000980e-02 : bf16
    %16 = vector.broadcast %cst_11 : bf16 to vector<16x128xbf16>
    %17 = arith.mulf %16, %15 : vector<16x128xbf16>
    %18 = arith.maximumf %15, %17 : vector<16x128xbf16>
    %c0_12 = arith.constant 0 : index
    %c0_13 = arith.constant 0 : index
    %19 = vector.load %arg6[%c0_12, %c0_13] : memref<128x128xbf16, #tpu.memory_space<vmem>>, vector<128x128xbf16>
    %cst_14 = arith.constant dense<0.000000e+00> : vector<16x128xf32>
    %20 = tpu.matmul %18, %19, %cst_14 {dimension_numbers = #tpu.dot_dimension_numbers<[1], [0], [0], [1], [0, 0, 1, 1], [], []>} : vector<16x128xbf16>, vector<128x128xbf16>, vector<16x128xf32> -> vector<16x128xf32>
    %c0_15 = arith.constant 0 : index
    %c0_16 = arith.constant 0 : index
    %21 = vector.load %arg7[%c0_15, %c0_16] : memref<1x128xf32, #tpu.memory_space<vmem>>, vector<1x128xf32>
    %22 = vector.broadcast %21 : vector<1x128xf32> to vector<16x128xf32>
    %23 = arith.addf %20, %22 : vector<16x128xf32>
    %24 = arith.truncf %23 : vector<16x128xf32> to vector<16x128xbf16>
    %cst_17 = arith.constant 1.000980e-02 : bf16
    %25 = vector.broadcast %cst_17 : bf16 to vector<16x128xbf16>
    %26 = arith.mulf %25, %24 : vector<16x128xbf16>
    %27 = arith.maximumf %24, %26 : vector<16x128xbf16>
    %c0_18 = arith.constant 0 : index
    %c0_19 = arith.constant 0 : index
    %28 = vector.load %arg8[%c0_18, %c0_19] : memref<128x128xbf16, #tpu.memory_space<vmem>>, vector<128x128xbf16>
    %cst_20 = arith.constant dense<0.000000e+00> : vector<16x128xf32>
    %29 = tpu.matmul %27, %28, %cst_20 {dimension_numbers = #tpu.dot_dimension_numbers<[1], [0], [0], [1], [0, 0, 1, 1], [], []>} : vector<16x128xbf16>, vector<128x128xbf16>, vector<16x128xf32> -> vector<16x128xf32>
    %30 = vector.extract_strided_slice %29 {offsets = [0, 0], sizes = [16, 1], strides = [1, 1]} : vector<16x128xf32> to vector<16x1xf32>
    %c0_21 = arith.constant 0 : index
    %c0_22 = arith.constant 0 : index
    %31 = vector.load %arg9[%c0_21, %c0_22] : memref<1x1xf32, #tpu.memory_space<vmem>>, vector<1x1xf32>
    %32 = vector.broadcast %31 : vector<1x1xf32> to vector<16x1xf32>
    %33 = arith.addf %30, %32 : vector<16x1xf32>
    %c0_23 = arith.constant 0 : index
    %c0_24 = arith.constant 0 : index
    %34 = vector.load %arg10[%c0_23, %c0_24] : memref<16x1xf32, #tpu.memory_space<vmem>>, vector<16x1xf32>
    tpu.vector_store %arg10[%c0_23, %c0_24], %33 {strides = array<i32>} : memref<16x1xf32, #tpu.memory_space<vmem>>, vector<16x1xf32>,
    return
  }
  func.func @transform_0(%arg0: i32) -> (i32, i32) {
    %c0_i32 = arith.constant 0 : i32
    %c0_i32_0 = arith.constant 0 : i32
    return %arg0, %c0_i32 : i32, i32
  }
  func.func @transform_1(%arg0: i32) -> (i32, i32) {
    %c0_i32 = arith.constant 0 : i32
    %c0_i32_0 = arith.constant 0 : i32
    %c0_i32_1 = arith.constant 0 : i32
    return %c0_i32, %c0_i32_0 : i32, i32
  }
  func.func @transform_2(%arg0: i32) -> (i32, i32) {
    %c0_i32 = arith.constant 0 : i32
    %c0_i32_0 = arith.constant 0 : i32
    %c0_i32_1 = arith.constant 0 : i32
    return %c0_i32, %c0_i32_0 : i32, i32
  }
  func.func @transform_3(%arg0: i32) -> (i32, i32) {
    %c0_i32 = arith.constant 0 : i32
    %c0_i32_0 = arith.constant 0 : i32
    %c0_i32_1 = arith.constant 0 : i32
    return %c0_i32, %c0_i32_0 : i32, i32
  }
  func.func @transform_4(%arg0: i32) -> (i32, i32) {
    %c0_i32 = arith.constant 0 : i32
    %c0_i32_0 = arith.constant 0 : i32
    %c0_i32_1 = arith.constant 0 : i32
    return %c0_i32, %c0_i32_0 : i32, i32
  }
  func.func @transform_5(%arg0: i32) -> (i32, i32) {
    %c0_i32 = arith.constant 0 : i32
    %c0_i32_0 = arith.constant 0 : i32
    %c0_i32_1 = arith.constant 0 : i32
    return %c0_i32, %c0_i32_0 : i32, i32
  }
  func.func @transform_6(%arg0: i32) -> (i32, i32) {
    %c0_i32 = arith.constant 0 : i32
    %c0_i32_0 = arith.constant 0 : i32
    %c0_i32_1 = arith.constant 0 : i32
    return %c0_i32, %c0_i32_0 : i32, i32
  }
  func.func @transform_7(%arg0: i32) -> (i32, i32) {
    %c0_i32 = arith.constant 0 : i32
    %c0_i32_0 = arith.constant 0 : i32
    %c0_i32_1 = arith.constant 0 : i32
    return %c0_i32, %c0_i32_0 : i32, i32
  }
  func.func @transform_8(%arg0: i32) -> (i32, i32) {
    %c0_i32 = arith.constant 0 : i32
    %c0_i32_0 = arith.constant 0 : i32
    %c0_i32_1 = arith.constant 0 : i32
    return %c0_i32, %c0_i32_0 : i32, i32
  }
  func.func @transform_9(%arg0: i32) -> (i32, i32) {
    %c0_i32 = arith.constant 0 : i32
    %c0_i32_0 = arith.constant 0 : i32
    return %arg0, %c0_i32 : i32, i32
  }
}

</mosaic_0001>

<llo_original>
// kernel: classification_head_forward.1
$region0: #{classification_head_forward.1}
  #allocation0 [shape = 'u32[]', space=smem, size = 0x4, offset = 0x4, fixed_abs, tag = 'smem constant byte address 0x4 - core index']
  #allocation1 [shape = 'u32[144,128]{1,0:T(1,128)}', space=vmem, size = 0x12000, scoped, tag = 'internal scratch']
  #allocation2 [shape = 'f32[1,1]{1,0:T(1,128)S(1)}', space=vmem, size = 0x200, scoped, tag = 'scoped memory for classification_head_forward.1']
  %s0 = inlined_call_operand.vmem [shape: bf16[16,128], index: 0, kind: input, shape index: {}]
  %s1 = inlined_call_operand.hbm [shape: bf16[128,256], index: 1, kind: input, shape index: {}]
  %s2 = inlined_call_operand.vmem [shape: f32[1,256], index: 2, kind: input, shape index: {}]
  %s3 = inlined_call_operand.hbm [shape: bf16[256,128], index: 3, kind: input, shape index: {}]
  %s4 = inlined_call_operand.vmem [shape: f32[1,128], index: 4, kind: input, shape index: {}]
  %s5 = inlined_call_operand.hbm [shape: bf16[128,128], index: 5, kind: input, shape index: {}]
  %s6 = inlined_call_operand.vmem [shape: f32[1,128], index: 6, kind: input, shape index: {}]
  %s7 = inlined_call_operand.hbm [shape: bf16[128,128], index: 7, kind: input, shape index: {}]
  %s8 = inlined_call_operand.<no memory space> [shape: f32[1,1], index: 8, kind: input, shape index: {}]
  %s9 = inlined_call_operand.vmem [shape: f32[16,1], index: 9, kind: output, shape index: {}]
  %s10 = sld [smem:[#allocation0]]
  $region62: #{classification_head_forward.1} parent=0
    _
  %s12 = ssub.s32 1, %s10
  %s13 = scalar_select 0, %s12, %s10
  %v14 = vstv %s8
  %15 = vst [vmem:[#allocation2] sm:$0x1] %v14
  $region1: #{classification_head_forward.1} parent=0
    #allocation3 [shape = 'u8[65536]{0}', space=vmem, size = 0x10000, scoped, tag = 'input window, operand 1, single buffered']
    #allocation4 [shape = 's32[1]{0}', space=sflag, size = 0x4, scoped, tag = 'scoped memory for classification_head_forward.1']
    #allocation5 [shape = 'u8[65536]{0}', space=vmem, size = 0x10000, scoped, tag = 'input window, operand 3, single buffered']
    #allocation6 [shape = 's32[1]{0}', space=sflag, size = 0x4, scoped, tag = 'scoped memory for classification_head_forward.1']
    #allocation7 [shape = 'u8[32768]{0}', space=vmem, size = 0x8000, scoped, tag = 'input window, operand 5, single buffered']
    #allocation8 [shape = 'u8[32768]{0}', space=vmem, size = 0x8000, scoped, tag = 'input window, operand 7, single buffered']
    #allocation9 [shape = 's32[1]{0}', space=sflag, size = 0x4, scoped, tag = 'scoped memory for classification_head_forward.1']
    %16 = vsyncpa [#allocation4], 0
    %17 = vsyncpa [#allocation6], 0
    %18 = vsyncpa [#allocation9], 0
    // Predicated region
    $region2: #{classification_head_forward.1} parent=1 // pred_check
      _
    $region3: #{classification_head_forward.1} parent=1 // pred_check_branch
      %20 = sbr.rel (0) target = $region5
    $region4: #{classification_head_forward.1} parent=1 // pred_region
      _
    $region5: #{classification_head_forward.1} parent=1 // pred_fallthru
      _
    // Predicated region
    $region6: #{classification_head_forward.1} parent=1 // pred_check
      _
    $region7: #{classification_head_forward.1} parent=1 // pred_check_branch
      %22 = sbr.rel (0) target = $region9
    $region8: #{classification_head_forward.1} parent=1 // pred_region
      %s24 = ssub.s32 2048, 2048
      %25 = vsyncadd [#allocation4], %s24
      %s26 = sshll.u32 [#allocation3], 4
      %s27 = int_to_ptr.vmem [resolvable:$true] %s26
      %32 = dma.hbm_to_vmem [thread:$0]  %s1, 2048, %s27, [#allocation4], 128, 128, 8
    $region9: #{classification_head_forward.1} parent=1 // pred_fallthru
      _
    // Predicated region
    $region10: #{classification_head_forward.1} parent=1 // pred_check
      _
    $region11: #{classification_head_forward.1} parent=1 // pred_check_branch
      %34 = sbr.rel (0) target = $region13
    $region12: #{classification_head_forward.1} parent=1 // pred_region
      _
    $region13: #{classification_head_forward.1} parent=1 // pred_fallthru
      _
    // Predicated region
    $region14: #{classification_head_forward.1} parent=1 // pred_check
      _
    $region15: #{classification_head_forward.1} parent=1 // pred_check_branch
      %36 = sbr.rel (0) target = $region17
    $region16: #{classification_head_forward.1} parent=1 // pred_region
      %s38 = ssub.s32 2048, 2048
      %39 = vsyncadd [#allocation6], %s38
      %s40 = sshll.u32 [#allocation5], 4
      %s41 = int_to_ptr.vmem [resolvable:$true] %s40
      %46 = dma.hbm_to_vmem [thread:$0]  %s3, 2048, %s41, [#allocation6], 64, 64, 4
    $region17: #{classification_head_forward.1} parent=1 // pred_fallthru
      _
    // Predicated region
    $region18: #{classification_head_forward.1} parent=1 // pred_check
      _
    $region19: #{classification_head_forward.1} parent=1 // pred_check_branch
      %48 = sbr.rel (0) target = $region21
    $region20: #{classification_head_forward.1} parent=1 // pred_region
      _
    $region21: #{classification_head_forward.1} parent=1 // pred_fallthru
      _
    // Predicated region
    $region22: #{classification_head_forward.1} parent=1 // pred_check
      _
    $region23: #{classification_head_forward.1} parent=1 // pred_check_branch
      %50 = sbr.rel (0) target = $region25
    $region24: #{classification_head_forward.1} parent=1 // pred_region
      %s52 = ssub.s32 1024, 1024
      %53 = vsyncadd [#allocation6], %s52
      %s54 = sshll.u32 [#allocation7], 4
      %s55 = int_to_ptr.vmem [resolvable:$true] %s54
      %60 = dma.hbm_to_vmem [thread:$0]  %s5, 1024, %s55, [#allocation6], 64, 64, 4
    $region25: #{classification_head_forward.1} parent=1 // pred_fallthru
      _
    // Predicated region
    $region26: #{classification_head_forward.1} parent=1 // pred_check
      _
    $region27: #{classification_head_forward.1} parent=1 // pred_check_branch
      %62 = sbr.rel (0) target = $region29
    $region28: #{classification_head_forward.1} parent=1 // pred_region
      _
    $region29: #{classification_head_forward.1} parent=1 // pred_fallthru
      _
    // Predicated region
    $region30: #{classification_head_forward.1} parent=1 // pred_check
      _
    $region31: #{classification_head_forward.1} parent=1 // pred_check_branch
      %64 = sbr.rel (0) target = $region33
    $region32: #{classification_head_forward.1} parent=1 // pred_region
      %s66 = ssub.s32 1024, 1024
      %67 = vsyncadd [#allocation9], %s66
      %s68 = sshll.u32 [#allocation8], 4
      %s69 = int_to_ptr.vmem [resolvable:$true] %s68
      %74 = dma.hbm_to_vmem [thread:$0]  %s7, 1024, %s69, [#allocation9], 64, 64, 4
    $region33: #{classification_head_forward.1} parent=1 // pred_fallthru
      _
    // Predicated region
    $region34: #{classification_head_forward.1} parent=1 // pred_check
      _
    $region35: #{classification_head_forward.1} parent=1 // pred_check_branch
      %76 = sbr.rel (0) target = $region37
    $region36: #{classification_head_forward.1} parent=1 // pred_region
      _
    $region37: #{classification_head_forward.1} parent=1 // pred_fallthru
      _
    // Predicated region
    $region38: #{classification_head_forward.1} parent=1 // pred_check
      _
    $region39: #{classification_head_forward.1} parent=1 // pred_check_branch
      %78 = sbr.rel (0) target = $region41
    $region40: #{classification_head_forward.1} parent=1 // pred_region
      %79 = dma.done [#allocation4], 2048
    $region41: #{classification_head_forward.1} parent=1 // pred_fallthru
      _
    // Predicated region
    $region42: #{classification_head_forward.1} parent=1 // pred_check
      _
    $region43: #{classification_head_forward.1} parent=1 // pred_check_branch
      %81 = sbr.rel (0) target = $region45
    $region44: #{classification_head_forward.1} parent=1 // pred_region
      %82 = dma.done [#allocation6], 2048
    $region45: #{classification_head_forward.1} parent=1 // pred_fallthru
      _
    // Predicated region
    $region46: #{classification_head_forward.1} parent=1 // pred_check
      _
    $region47: #{classification_head_forward.1} parent=1 // pred_check_branch
      %84 = sbr.rel (0) target = $region49
    $region48: #{classification_head_forward.1} parent=1 // pred_region
      %85 = dma.done [#allocation6], 1024
    $region49: #{classification_head_forward.1} parent=1 // pred_fallthru
      _
    // Predicated region
    $region50: #{classification_head_forward.1} parent=1 // pred_check
      _
    $region51: #{classification_head_forward.1} parent=1 // pred_check_branch
      %87 = sbr.rel (0) target = $region53
    $region52: #{classification_head_forward.1} parent=1 // pred_region
      %88 = dma.done [#allocation9], 1024
    $region53: #{classification_head_forward.1} parent=1 // pred_fallthru
      _
    %v91 = vld [vmem:[%s0] sm:$0xf]
    %v92 = vld [vmem:[%s0 + $0x4] sm:$0xf]
    %v93 = vld [vmem:[#allocation3] sm:$0xff]
    %v94 = vld [vmem:[#allocation3 + $0x8] sm:$0xff]
    %v95 = vld [vmem:[#allocation3 + $0x10] sm:$0xff]
    %v96 = vld [vmem:[#allocation3 + $0x18] sm:$0xff]
    %v97 = vld [vmem:[#allocation3 + $0x20] sm:$0xff]
    %v98 = vld [vmem:[#allocation3 + $0x28] sm:$0xff]
    %v99 = vld [vmem:[#allocation3 + $0x30] sm:$0xff]
    %v100 = vld [vmem:[#allocation3 + $0x38] sm:$0xff]
    %v101 = vld [vmem:[#allocation3 + $0x40] sm:$0xff]
    %v102 = vld [vmem:[#allocation3 + $0x48] sm:$0xff]
    %v103 = vld [vmem:[#allocation3 + $0x50] sm:$0xff]
    %v104 = vld [vmem:[#allocation3 + $0x58] sm:$0xff]
    %v105 = vld [vmem:[#allocation3 + $0x60] sm:$0xff]
    %v106 = vld [vmem:[#allocation3 + $0x68] sm:$0xff]
    %v107 = vld [vmem:[#allocation3 + $0x70] sm:$0xff]
    %v108 = vld [vmem:[#allocation3 + $0x78] sm:$0xff]
    %v109 = vld [vmem:[%s2] sm:$0x3]
    %v111 = vlaneseq
    %v112 = vshrl.u32 %v111, 7
    %v113 = vsub.s32 0, %v112
    %v114 = vrot.slane %v109, %v113
    %v115 = vlaneseq
    %v116 = vshrl.u32 %v115, 7
    %v117 = vsub.s32 1, %v116
    %v118 = vrot.slane %v109, %v117
    %v123 = vunpack.c.l.b16 %v91
    %v124 = vunpack.c.l.b16 %v92
    %v125 = vpack.c.b16 %v124, %v123
    %v143 = vunpack.c.l.b16 %v93
    %v144 = vunpack.c.h.b16 %v93
    %v145 = vunpack.c.l.b16 %v94
    %v146 = vunpack.c.h.b16 %v94
    %v147 = vunpack.c.l.b16 %v95
    %v148 = vunpack.c.h.b16 %v95
    %v149 = vunpack.c.l.b16 %v96
    %v150 = vunpack.c.h.b16 %v96
    %v151 = vunpack.c.l.b16 %v97
    %v152 = vunpack.c.h.b16 %v97
    %v153 = vunpack.c.l.b16 %v98
    %v154 = vunpack.c.h.b16 %v98
    %v155 = vunpack.c.l.b16 %v99
    %v156 = vunpack.c.h.b16 %v99
    %v157 = vunpack.c.l.b16 %v100
    %v158 = vunpack.c.h.b16 %v100
    %v159 = vunpack.c.l.b16 %v101
    %v160 = vunpack.c.h.b16 %v101
    %v161 = vunpack.c.l.b16 %v102
    %v162 = vunpack.c.h.b16 %v102
    %v163 = vunpack.c.l.b16 %v103
    %v164 = vunpack.c.h.b16 %v103
    %v165 = vunpack.c.l.b16 %v104
    %v166 = vunpack.c.h.b16 %v104
    %v167 = vunpack.c.l.b16 %v105
    %v168 = vunpack.c.h.b16 %v105
    %v169 = vunpack.c.l.b16 %v106
    %v170 = vunpack.c.h.b16 %v106
    %v171 = vunpack.c.l.b16 %v107
    %v172 = vunpack.c.h.b16 %v107
    %v173 = vunpack.c.l.b16 %v108
    %v174 = vunpack.c.h.b16 %v108
    %v175 = vpack.c.b16 %v145, %v143
    %v176 = vpack.c.b16 %v146, %v144
    %v177 = vpack.c.b16 %v149, %v147
    %v178 = vpack.c.b16 %v150, %v148
    %v179 = vpack.c.b16 %v153, %v151
    %v180 = vpack.c.b16 %v154, %v152
    %v181 = vpack.c.b16 %v157, %v155
    %v182 = vpack.c.b16 %v158, %v156
    %v183 = vpack.c.b16 %v161, %v159
    %v184 = vpack.c.b16 %v162, %v160
    %v185 = vpack.c.b16 %v165, %v163
    %v186 = vpack.c.b16 %v166, %v164
    %v187 = vpack.c.b16 %v169, %v167
    %v188 = vpack.c.b16 %v170, %v168
    %v189 = vpack.c.b16 %v173, %v171
    %v190 = vpack.c.b16 %v174, %v172
    %207 = vmatprep.subr.bf16.mxu0 %v190
    %208 = vmatpush1.bf16.msra.mxu0 %v189
    %209 = vmatprep.subr.bf16.mxu0 %v188
    %210 = vmatpush1.bf16.msra.mxu0 %v187
    %211 = vmatprep.subr.bf16.mxu0 %v186
    %212 = vmatpush1.bf16.msra.mxu0 %v185
    %213 = vmatprep.subr.bf16.mxu0 %v184
    %214 = vmatpush1.bf16.msra.mxu0 %v183
    %215 = vmatprep.subr.bf16.mxu0 %v182
    %216 = vmatpush1.bf16.msra.mxu0 %v181
    %217 = vmatprep.subr.bf16.mxu0 %v180
    %218 = vmatpush1.bf16.msra.mxu0 %v179
    %219 = vmatprep.subr.bf16.mxu0 %v178
    %220 = vmatpush1.bf16.msra.mxu0 %v177
    %221 = vmatprep.subr.bf16.mxu0 %v176
    %222 = vmatpush1.bf16.msra.mxu0 %v175
    %223 = vmatprep.subr.bf16.mxu0 0
    %224 = vmatpush2.bf16.msra.mxu0 0
    %225 = vmatprep.subr.bf16.mxu0 0
    %226 = vmatpush2.bf16.msra.mxu0 0
    %227 = vmatprep.subr.bf16.mxu0 0
    %228 = vmatpush2.bf16.msra.mxu0 0
    %229 = vmatprep.subr.bf16.mxu0 0
    %230 = vmatpush2.bf16.msra.mxu0 0
    %231 = vmatprep.subr.bf16.mxu0 0
    %232 = vmatpush2.bf16.msra.mxu0 0
    %233 = vmatprep.subr.bf16.mxu0 0
    %234 = vmatpush2.bf16.msra.mxu0 0
    %235 = vmatprep.subr.bf16.mxu0 0
    %236 = vmatpush2.bf16.msra.mxu0 0
    %237 = vmatprep.subr.bf16.mxu0 0
    %238 = vmatpush2.bf16.msra.mxu0 0
    %239 = vmatprep.mubr.bf16.mxu0 0
    %240 = vmatmul.mubr.bf16.gmra.mxu0 %v125
    %v241 = vpop.f32.mrf.mxu0
    %v242 = vadd.f32 %v114, %v241
    %v243 = vpop.f32.mrf.mxu0
    %v244 = vadd.f32 %v118, %v243
    %v245 = vpop.f32.mrf.mxu0
    %v246 = vadd.f32 %v114, %v245
    %v247 = vpop.f32.mrf.mxu0
    %v248 = vadd.f32 %v118, %v247
    %249 = vdwg.mxu0
    %v250 = vpack.c.bf16 %v246, %v242
    %v251 = vpack.c.bf16 %v248, %v244
    %v252 = vmul.bf16 %v250, 1009007652
    %v253 = vmul.bf16 %v251, 1009007652
    %v254 = vmax.bf16 %v250, %v252
    %v255 = vmax.bf16 %v251, %v253
    %v256 = vld [vmem:[#allocation5] sm:$0xf]
    %v257 = vld [vmem:[#allocation5 + $0x4] sm:$0xf]
    %v258 = vld [vmem:[#allocation5 + $0x8] sm:$0xf]
    %v259 = vld [vmem:[#allocation5 + $0xc] sm:$0xf]
    %v260 = vld [vmem:[#allocation5 + $0x10] sm:$0xf]
    %v261 = vld [vmem:[#allocation5 + $0x14] sm:$0xf]
    %v262 = vld [vmem:[#allocation5 + $0x18] sm:$0xf]
    %v263 = vld [vmem:[#allocation5 + $0x1c] sm:$0xf]
    %v264 = vld [vmem:[#allocation5 + $0x20] sm:$0xf]
    %v265 = vld [vmem:[#allocation5 + $0x24] sm:$0xf]
    %v266 = vld [vmem:[#allocation5 + $0x28] sm:$0xf]
    %v267 = vld [vmem:[#allocation5 + $0x2c] sm:$0xf]
    %v268 = vld [vmem:[#allocation5 + $0x30] sm:$0xf]
    %v269 = vld [vmem:[#allocation5 + $0x34] sm:$0xf]
    %v270 = vld [vmem:[#allocation5 + $0x38] sm:$0xf]
    %v271 = vld [vmem:[#allocation5 + $0x3c] sm:$0xf]
    %v272 = vld [vmem:[#allocation5 + $0x40] sm:$0xf]
    %v273 = vld [vmem:[#allocation5 + $0x44] sm:$0xf]
    %v274 = vld [vmem:[#allocation5 + $0x48] sm:$0xf]
    %v275 = vld [vmem:[#allocation5 + $0x4c] sm:$0xf]
    %v276 = vld [vmem:[#allocation5 + $0x50] sm:$0xf]
    %v277 = vld [vmem:[#allocation5 + $0x54] sm:$0xf]
    %v278 = vld [vmem:[#allocation5 + $0x58] sm:$0xf]
    %v279 = vld [vmem:[#allocation5 + $0x5c] sm:$0xf]
    %v280 = vld [vmem:[#allocation5 + $0x60] sm:$0xf]
    %v281 = vld [vmem:[#allocation5 + $0x64] sm:$0xf]
    %v282 = vld [vmem:[#allocation5 + $0x68] sm:$0xf]
    %v283 = vld [vmem:[#allocation5 + $0x6c] sm:$0xf]
    %v284 = vld [vmem:[#allocation5 + $0x70] sm:$0xf]
    %v285 = vld [vmem:[#allocation5 + $0x74] sm:$0xf]
    %v286 = vld [vmem:[#allocation5 + $0x78] sm:$0xf]
    %v287 = vld [vmem:[#allocation5 + $0x7c] sm:$0xf]
    %v288 = vld [vmem:[%s4] sm:$0x1]
    %v290 = vlaneseq
    %v291 = vshrl.u32 %v290, 7
    %v292 = vsub.s32 0, %v291
    %v293 = vrot.slane %v288, %v292
    %v327 = vunpack.c.l.b16 %v256
    %v328 = vunpack.c.l.b16 %v257
    %v329 = vunpack.c.l.b16 %v258
    %v330 = vunpack.c.l.b16 %v259
    %v331 = vunpack.c.l.b16 %v260
    %v332 = vunpack.c.l.b16 %v261
    %v333 = vunpack.c.l.b16 %v262
    %v334 = vunpack.c.l.b16 %v263
    %v335 = vunpack.c.l.b16 %v264
    %v336 = vunpack.c.l.b16 %v265
    %v337 = vunpack.c.l.b16 %v266
    %v338 = vunpack.c.l.b16 %v267
    %v339 = vunpack.c.l.b16 %v268
    %v340 = vunpack.c.l.b16 %v269
    %v341 = vunpack.c.l.b16 %v270
    %v342 = vunpack.c.l.b16 %v271
    %v343 = vunpack.c.l.b16 %v272
    %v344 = vunpack.c.l.b16 %v273
    %v345 = vunpack.c.l.b16 %v274
    %v346 = vunpack.c.l.b16 %v275
    %v347 = vunpack.c.l.b16 %v276
    %v348 = vunpack.c.l.b16 %v277
    %v349 = vunpack.c.l.b16 %v278
    %v350 = vunpack.c.l.b16 %v279
    %v351 = vunpack.c.l.b16 %v280
    %v352 = vunpack.c.l.b16 %v281
    %v353 = vunpack.c.l.b16 %v282
    %v354 = vunpack.c.l.b16 %v283
    %v355 = vunpack.c.l.b16 %v284
    %v356 = vunpack.c.l.b16 %v285
    %v357 = vunpack.c.l.b16 %v286
    %v358 = vunpack.c.l.b16 %v287
    %v359 = vpack.c.b16 %v328, %v327
    %v360 = vpack.c.b16 %v330, %v329
    %v361 = vpack.c.b16 %v332, %v331
    %v362 = vpack.c.b16 %v334, %v333
    %v363 = vpack.c.b16 %v336, %v335
    %v364 = vpack.c.b16 %v338, %v337
    %v365 = vpack.c.b16 %v340, %v339
    %v366 = vpack.c.b16 %v342, %v341
    %v367 = vpack.c.b16 %v344, %v343
    %v368 = vpack.c.b16 %v346, %v345
    %v369 = vpack.c.b16 %v348, %v347
    %v370 = vpack.c.b16 %v350, %v349
    %v371 = vpack.c.b16 %v352, %v351
    %v372 = vpack.c.b16 %v354, %v353
    %v373 = vpack.c.b16 %v356, %v355
    %v374 = vpack.c.b16 %v358, %v357
    %391 = vmatprep.subr.bf16.mxu0 0
    %392 = vmatpush1.bf16.msra.mxu0 %v366
    %393 = vmatprep.subr.bf16.mxu0 0
    %394 = vmatpush1.bf16.msra.mxu0 %v365
    %395 = vmatprep.subr.bf16.mxu0 0
    %396 = vmatpush1.bf16.msra.mxu0 %v364
    %397 = vmatprep.subr.bf16.mxu0 0
    %398 = vmatpush1.bf16.msra.mxu0 %v363
    %399 = vmatprep.subr.bf16.mxu0 0
    %400 = vmatpush1.bf16.msra.mxu0 %v362
    %401 = vmatprep.subr.bf16.mxu0 0
    %402 = vmatpush1.bf16.msra.mxu0 %v361
    %403 = vmatprep.subr.bf16.mxu0 0
    %404 = vmatpush1.bf16.msra.mxu0 %v360
    %405 = vmatprep.subr.bf16.mxu0 0
    %406 = vmatpush1.bf16.msra.mxu0 %v359
    %407 = vmatprep.subr.bf16.mxu0 0
    %408 = vmatpush2.bf16.msra.mxu0 %v374
    %409 = vmatprep.subr.bf16.mxu0 0
    %410 = vmatpush2.bf16.msra.mxu0 %v373
    %411 = vmatprep.subr.bf16.mxu0 0
    %412 = vmatpush2.bf16.msra.mxu0 %v372
    %413 = vmatprep.subr.bf16.mxu0 0
    %414 = vmatpush2.bf16.msra.mxu0 %v371
    %415 = vmatprep.subr.bf16.mxu0 0
    %416 = vmatpush2.bf16.msra.mxu0 %v370
    %417 = vmatprep.subr.bf16.mxu0 0
    %418 = vmatpush2.bf16.msra.mxu0 %v369
    %419 = vmatprep.subr.bf16.mxu0 0
    %420 = vmatpush2.bf16.msra.mxu0 %v368
    %421 = vmatprep.subr.bf16.mxu0 0
    %422 = vmatpush2.bf16.msra.mxu0 %v367
    %423 = vmatprep.mubr.bf16.mxu0 %v255
    %424 = vmatmul.mubr.bf16.gmra.mxu0 %v254
    %v425 = vpop.f32.mrf.mxu0
    %v426 = vadd.f32 %v293, %v425
    %v427 = vpop.f32.mrf.mxu0
    %v428 = vpop.f32.mrf.mxu0
    %v429 = vadd.f32 %v293, %v428
    %v430 = vpop.f32.mrf.mxu0
    %431 = vdwg.mxu0
    %v432 = vpack.c.bf16 %v429, %v426
    %v433 = vmul.bf16 %v432, 1009007652
    %v434 = vmax.bf16 %v432, %v433
    %v435 = vld [vmem:[#allocation7] sm:$0xf]
    %v436 = vld [vmem:[#allocation7 + $0x4] sm:$0xf]
    %v437 = vld [vmem:[#allocation7 + $0x8] sm:$0xf]
    %v438 = vld [vmem:[#allocation7 + $0xc] sm:$0xf]
    %v439 = vld [vmem:[#allocation7 + $0x10] sm:$0xf]
    %v440 = vld [vmem:[#allocation7 + $0x14] sm:$0xf]
    %v441 = vld [vmem:[#allocation7 + $0x18] sm:$0xf]
    %v442 = vld [vmem:[#allocation7 + $0x1c] sm:$0xf]
    %v443 = vld [vmem:[#allocation7 + $0x20] sm:$0xf]
    %v444 = vld [vmem:[#allocation7 + $0x24] sm:$0xf]
    %v445 = vld [vmem:[#allocation7 + $0x28] sm:$0xf]
    %v446 = vld [vmem:[#allocation7 + $0x2c] sm:$0xf]
    %v447 = vld [vmem:[#allocation7 + $0x30] sm:$0xf]
    %v448 = vld [vmem:[#allocation7 + $0x34] sm:$0xf]
    %v449 = vld [vmem:[#allocation7 + $0x38] sm:$0xf]
    %v450 = vld [vmem:[#allocation7 + $0x3c] sm:$0xf]
    %v451 = vld [vmem:[%s6] sm:$0x1]
    %v453 = vlaneseq
    %v454 = vshrl.u32 %v453, 7
    %v455 = vsub.s32 0, %v454
    %v456 = vrot.slane %v451, %v455
    %v474 = vunpack.c.l.b16 %v435
    %v475 = vunpack.c.l.b16 %v436
    %v476 = vunpack.c.l.b16 %v437
    %v477 = vunpack.c.l.b16 %v438
    %v478 = vunpack.c.l.b16 %v439
    %v479 = vunpack.c.l.b16 %v440
    %v480 = vunpack.c.l.b16 %v441
    %v481 = vunpack.c.l.b16 %v442
    %v482 = vunpack.c.l.b16 %v443
    %v483 = vunpack.c.l.b16 %v444
    %v484 = vunpack.c.l.b16 %v445
    %v485 = vunpack.c.l.b16 %v446
    %v486 = vunpack.c.l.b16 %v447
    %v487 = vunpack.c.l.b16 %v448
    %v488 = vunpack.c.l.b16 %v449
    %v489 = vunpack.c.l.b16 %v450
    %v490 = vpack.c.b16 %v475, %v474
    %v491 = vpack.c.b16 %v477, %v476
    %v492 = vpack.c.b16 %v479, %v478
    %v493 = vpack.c.b16 %v481, %v480
    %v494 = vpack.c.b16 %v483, %v482
    %v495 = vpack.c.b16 %v485, %v484
    %v496 = vpack.c.b16 %v487, %v486
    %v497 = vpack.c.b16 %v489, %v488
    %506 = vmatprep.subr.bf16.mxu0 0
    %507 = vmatpush1.bf16.msra.mxu0 %v497
    %508 = vmatprep.subr.bf16.mxu0 0
    %509 = vmatpush1.bf16.msra.mxu0 %v496
    %510 = vmatprep.subr.bf16.mxu0 0
    %511 = vmatpush1.bf16.msra.mxu0 %v495
    %512 = vmatprep.subr.bf16.mxu0 0
    %513 = vmatpush1.bf16.msra.mxu0 %v494
    %514 = vmatprep.subr.bf16.mxu0 0
    %515 = vmatpush1.bf16.msra.mxu0 %v493
    %516 = vmatprep.subr.bf16.mxu0 0
    %517 = vmatpush1.bf16.msra.mxu0 %v492
    %518 = vmatprep.subr.bf16.mxu0 0
    %519 = vmatpush1.bf16.msra.mxu0 %v491
    %520 = vmatprep.subr.bf16.mxu0 0
    %521 = vmatpush1.bf16.msra.mxu0 %v490
    %522 = vmatprep.subr.bf16.mxu0 0
    %523 = vmatpush2.bf16.msra.mxu0 0
    %524 = vmatprep.subr.bf16.mxu0 0
    %525 = vmatpush2.bf16.msra.mxu0 0
    %526 = vmatprep.subr.bf16.mxu0 0
    %527 = vmatpush2.bf16.msra.mxu0 0
    %528 = vmatprep.subr.bf16.mxu0 0
    %529 = vmatpush2.bf16.msra.mxu0 0
    %530 = vmatprep.subr.bf16.mxu0 0
    %531 = vmatpush2.bf16.msra.mxu0 0
    %532 = vmatprep.subr.bf16.mxu0 0
    %533 = vmatpush2.bf16.msra.mxu0 0
    %534 = vmatprep.subr.bf16.mxu0 0
    %535 = vmatpush2.bf16.msra.mxu0 0
    %536 = vmatprep.subr.bf16.mxu0 0
    %537 = vmatpush2.bf16.msra.mxu0 0
    %538 = vmatprep.mubr.bf16.mxu0 0
    %539 = vmatmul.mubr.bf16.gmra.mxu0 %v434
    %v540 = vpop.f32.mrf.mxu0
    %v541 = vadd.f32 %v456, %v540
    %v542 = vpop.f32.mrf.mxu0
    %v543 = vpop.f32.mrf.mxu0
    %v544 = vadd.f32 %v456, %v543
    %v545 = vpop.f32.mrf.mxu0
    %546 = vdwg.mxu0
    %v547 = vpack.c.bf16 %v544, %v541
    %v548 = vmul.bf16 %v547, 1009007652
    %v549 = vmax.bf16 %v547, %v548
    %v550 = vld [vmem:[#allocation8] sm:$0xf]
    %v551 = vld [vmem:[#allocation8 + $0x4] sm:$0xf]
    %v552 = vld [vmem:[#allocation8 + $0x8] sm:$0xf]
    %v553 = vld [vmem:[#allocation8 + $0xc] sm:$0xf]
    %v554 = vld [vmem:[#allocation8 + $0x10] sm:$0xf]
    %v555 = vld [vmem:[#allocation8 + $0x14] sm:$0xf]
    %v556 = vld [vmem:[#allocation8 + $0x18] sm:$0xf]
    %v557 = vld [vmem:[#allocation8 + $0x1c] sm:$0xf]
    %v558 = vld [vmem:[#allocation8 + $0x20] sm:$0xf]
    %v559 = vld [vmem:[#allocation8 + $0x24] sm:$0xf]
    %v560 = vld [vmem:[#allocation8 + $0x28] sm:$0xf]
    %v561 = vld [vmem:[#allocation8 + $0x2c] sm:$0xf]
    %v562 = vld [vmem:[#allocation8 + $0x30] sm:$0xf]
    %v563 = vld [vmem:[#allocation8 + $0x34] sm:$0xf]
    %v564 = vld [vmem:[#allocation8 + $0x38] sm:$0xf]
    %v565 = vld [vmem:[#allocation8 + $0x3c] sm:$0xf]
    %v582 = vunpack.c.l.b16 %v550
    %v583 = vunpack.c.l.b16 %v551
    %v584 = vunpack.c.l.b16 %v552
    %v585 = vunpack.c.l.b16 %v553
    %v586 = vunpack.c.l.b16 %v554
    %v587 = vunpack.c.l.b16 %v555
    %v588 = vunpack.c.l.b16 %v556
    %v589 = vunpack.c.l.b16 %v557
    %v590 = vunpack.c.l.b16 %v558
    %v591 = vunpack.c.l.b16 %v559
    %v592 = vunpack.c.l.b16 %v560
    %v593 = vunpack.c.l.b16 %v561
    %v594 = vunpack.c.l.b16 %v562
    %v595 = vunpack.c.l.b16 %v563
    %v596 = vunpack.c.l.b16 %v564
    %v597 = vunpack.c.l.b16 %v565
    %v598 = vpack.c.b16 %v583, %v582
    %v599 = vpack.c.b16 %v585, %v584
    %v600 = vpack.c.b16 %v587, %v586
    %v601 = vpack.c.b16 %v589, %v588
    %v602 = vpack.c.b16 %v591, %v590
    %v603 = vpack.c.b16 %v593, %v592
    %v604 = vpack.c.b16 %v595, %v594
    %v605 = vpack.c.b16 %v597, %v596
    %614 = vmatprep.subr.bf16.mxu0 0
    %615 = vmatpush1.bf16.msra.mxu0 %v605
    %616 = vmatprep.subr.bf16.mxu0 0
    %617 = vmatpush1.bf16.msra.mxu0 %v604
    %618 = vmatprep.subr.bf16.mxu0 0
    %619 = vmatpush1.bf16.msra.mxu0 %v603
    %620 = vmatprep.subr.bf16.mxu0 0
    %621 = vmatpush1.bf16.msra.mxu0 %v602
    %622 = vmatprep.subr.bf16.mxu0 0
    %623 = vmatpush1.bf16.msra.mxu0 %v601
    %624 = vmatprep.subr.bf16.mxu0 0
    %625 = vmatpush1.bf16.msra.mxu0 %v600
    %626 = vmatprep.subr.bf16.mxu0 0
    %627 = vmatpush1.bf16.msra.mxu0 %v599
    %628 = vmatprep.subr.bf16.mxu0 0
    %629 = vmatpush1.bf16.msra.mxu0 %v598
    %630 = vmatprep.subr.bf16.mxu0 0
    %631 = vmatpush2.bf16.msra.mxu0 0
    %632 = vmatprep.subr.bf16.mxu0 0
    %633 = vmatpush2.bf16.msra.mxu0 0
    %634 = vmatprep.subr.bf16.mxu0 0
    %635 = vmatpush2.bf16.msra.mxu0 0
    %636 = vmatprep.subr.bf16.mxu0 0
    %637 = vmatpush2.bf16.msra.mxu0 0
    %638 = vmatprep.subr.bf16.mxu0 0
    %639 = vmatpush2.bf16.msra.mxu0 0
    %640 = vmatprep.subr.bf16.mxu0 0
    %641 = vmatpush2.bf16.msra.mxu0 0
    %642 = vmatprep.subr.bf16.mxu0 0
    %643 = vmatpush2.bf16.msra.mxu0 0
    %644 = vmatprep.subr.bf16.mxu0 0
    %645 = vmatpush2.bf16.msra.mxu0 0
    %646 = vmatprep.mubr.bf16.mxu0 0
    %647 = vmatmul.mubr.bf16.gmra.mxu0 %v549
    %v648 = vpop.f32.mrf.mxu0
    %v649 = vadd.f32 0.0, %v648
    %v650 = vpop.f32.mrf.mxu0
    %v651 = vpop.f32.mrf.mxu0
    %v652 = vadd.f32 0.0, %v651
    %v653 = vpop.f32.mrf.mxu0
    %654 = vdwg.mxu0
    %v655 = vld [vmem:[#allocation2] sm:$0x1]
    %v657 = vlaneseq
    %v658 = vshrl.u32 %v657, 7
    %v659 = vsub.s32 0, %v658
    %v660 = vrot.slane %v655, %v659
    %v662 = vadd.f32 %v649, %v660
    %v663 = vadd.f32 %v652, %v660
    %vm664 = vcmask 7168
    %665 = vst.msk [vmem:[%s9] sm:$0xff] %vm664, %v662
    %666 = vst.msk [vmem:[%s9 + $0x8] sm:$0xff] %vm664, %v663
    // Predicated region
    $region54: #{classification_head_forward.1} parent=1 // pred_check
      _
    $region55: #{classification_head_forward.1} parent=1 // pred_check_branch
      %668 = sbr.rel (0) target = $region57
    $region56: #{classification_head_forward.1} parent=1 // pred_region
      _
    $region57: #{classification_head_forward.1} parent=1 // pred_fallthru
      _
    // Predicated region
    $region58: #{classification_head_forward.1} parent=1 // pred_check
      _
    $region59: #{classification_head_forward.1} parent=1 // pred_check_branch
      %670 = sbr.rel (0) target = $region61
    $region60: #{classification_head_forward.1} parent=1 // pred_region
      _
    $region61: #{classification_head_forward.1} parent=1 // pred_fallthru
      _
    %671 = vsyncpa [#allocation4], 1
    %672 = vsyncpa [#allocation6], 1
    %673 = vsyncpa [#allocation9], 1

</llo_original>
